<compile_context>
chip_gen: v6e
topology: v6e:2x2x1
jax: 0.10.0
libtpu: 0.0.40
codegen_flags: <defaults>
</compile_context>

<pallas_src>
import jax
import jax.numpy as jnp
from jax.experimental import pallas as pl
from jax.experimental.pallas import tpu as pltpu


def _cf_dot_kernel(u_idx_ref, i_idx_ref, u_emb_ref, i_emb_ref, out_ref,
                   u_rows_ref, i_rows_ref):
    # u_idx_ref / i_idx_ref : (B_pad,) int32 indices in SMEM (scalar prefetch).
    # u_emb_ref / i_emb_ref : full embedding tables, VMEM-resident.
    # out_ref               : (1, TB) lane-dense output tile.
    # u_rows_ref/i_rows_ref : (TB, D) VMEM scratch holding the gathered rows.
    tb = out_ref.shape[1]
    base = pl.program_id(0) * tb

    # VMEM-side gather: one dynamic row copy per batch element of this tile.
    @pl.loop(0, tb)
    def _(b):
        u_rows_ref[b, :] = u_emb_ref[u_idx_ref[base + b], :]
        i_rows_ref[b, :] = i_emb_ref[i_idx_ref[base + b], :]

    # (D, TB) layout: batch on lanes, embedding dim on sublanes. The sublane
    # reduce yields a lane-dense (1, TB) result that is stored directly.
    u_t = jnp.transpose(u_rows_ref[...])          # (D, TB)
    i_t = jnp.transpose(i_rows_ref[...])          # (D, TB)
    out_ref[...] = jnp.sum(u_t * i_t, axis=0, keepdims=True)


def cf_forward(user_indices, item_indices, user_emb, item_emb, *, tb=256):
    """Pallas equivalent of CFModel.forward. Returns (B,) float32."""
    B = user_indices.shape[0]
    n_users, D = user_emb.shape
    n_items, _ = item_emb.shape

    user_emb = user_emb.astype(jnp.float32)
    item_emb = item_emb.astype(jnp.float32)

    # Pad the batch to a multiple of the tile size (padded indices are 0,
    # which is always a valid row; padded outputs are sliced off below).
    b_pad = ((B + tb - 1) // tb) * tb
    pad = b_pad - B
    u_idx = jnp.pad(user_indices.astype(jnp.int32), (0, pad))
    i_idx = jnp.pad(item_indices.astype(jnp.int32), (0, pad))
    n_tiles = b_pad // tb

    table_bytes = (n_users + n_items) * D * 4
    # TODO(synk): if the tables do not fit VMEM (esp. v7x's 64 MiB), switch to
    # a manual double-buffered multi-row DMA gather instead of table residency.
    vmem_limit = int(min(max(2 * table_bytes + (8 << 20), 32 << 20), 64 << 20))

    grid_spec = pltpu.PrefetchScalarGridSpec(
        num_scalar_prefetch=2,              # user_indices, item_indices -> SMEM
        grid=(n_tiles,),                    # one grid step per TB batch elems
        in_specs=[
            # Full tables, constant block index -> resident in VMEM.
            pl.BlockSpec((n_users, D), lambda t, u, i: (0, 0)),
            pl.BlockSpec((n_items, D), lambda t, u, i: (0, 0)),
        ],
        out_specs=pl.BlockSpec((1, tb), lambda t, u, i: (0, t)),
        scratch_shapes=[
            pltpu.VMEM((tb, D), jnp.float32),
            pltpu.VMEM((tb, D), jnp.float32),
        ],
    )

    out = pl.pallas_call(
        _cf_dot_kernel,
        out_shape=jax.ShapeDtypeStruct((1, b_pad), jnp.float32),
        grid_spec=grid_spec,
        compiler_params=pltpu.CompilerParams(
            dimension_semantics=("parallel",),
            vmem_limit_bytes=vmem_limit,
        ),
        cost_estimate=pl.CostEstimate(
            flops=2 * b_pad * D,
            transcendentals=0,
            bytes_accessed=table_bytes + 2 * b_pad * D * 4 + b_pad * 4,
        ),
    )(u_idx, i_idx, user_emb, item_emb)

    return out[0, :B]


if __name__ == "__main__":
    # Small synthetic shapes consistent with CFModel(n_users, n_items, embedding_dim).
    n_users, n_items, embedding_dim = 100, 50, 32
    batch = 8

    key = jax.random.PRNGKey(0)
    k_u, k_i, k_ui, k_ii = jax.random.split(key, 4)

    # nn.init.normal_(weight, std=0.01) for both embedding tables.
    user_emb = (0.01 * jax.random.normal(k_u, (n_users, embedding_dim))).astype(jnp.float32)
    item_emb = (0.01 * jax.random.normal(k_i, (n_items, embedding_dim))).astype(jnp.float32)

    user_indices = jax.random.randint(k_ui, (batch,), 0, n_users, dtype=jnp.int32)
    item_indices = jax.random.randint(k_ii, (batch,), 0, n_items, dtype=jnp.int32)

    out = jax.block_until_ready(
        cf_forward(user_indices, item_indices, user_emb, item_emb))

    # Pure-JAX reference for the same semantics.
    ref = jnp.sum(user_emb[user_indices] * item_emb[item_indices], axis=1)
    assert out.shape == (batch,)
    assert out.dtype == jnp.float32
    assert jnp.allclose(out, ref, atol=1e-6, rtol=1e-6)

    print("KERNEL_OK")
</pallas_src>

<mosaic_0001>
module attributes {stable_mosaic.version = 11 : i64} {
  func.func @_cf_dot_kernel(%arg0: i32, %arg1: memref<256xi32, #tpu.memory_space<smem>>, %arg2: memref<256xi32, #tpu.memory_space<smem>>, %arg3: memref<100x32xf32, #tpu.memory_space<vmem>>, %arg4: memref<50x32xf32, #tpu.memory_space<vmem>>, %arg5: memref<1x256xf32, #tpu.memory_space<vmem>>, %arg6: memref<256x32xf32, #tpu.memory_space<vmem>>, %arg7: memref<256x32xf32, #tpu.memory_space<vmem>>) attributes {dimension_semantics = [#tpu.dimension_semantics<parallel>], iteration_bounds = array<i64: 1>, scalar_prefetch = 2 : i64, scratch_operands = 2 : i64, tpu.core_type = #tpu.core_type<tc>, window_params = [{pipeline_mode = #tpu.pipeline_mode<synchronous>, transform_indices = @transform_0, window_bounds = array<i64: 100, 32>}, {pipeline_mode = #tpu.pipeline_mode<synchronous>, transform_indices = @transform_1, window_bounds = array<i64: 50, 32>}, {transform_indices = @transform_2, window_bounds = array<i64: 1, 256>}]} {
    %c256_i32 = arith.constant 256 : i32
    %0 = arith.muli %arg0, %c256_i32 : i32
    %c0_i32 = arith.constant 0 : i32
    %c256_i32_0 = arith.constant 256 : i32
    %1 = arith.addi %c0_i32, %c256_i32_0 : i32
    %c1_i32 = arith.constant 1 : i32
    scf.for %arg8 = %c0_i32 to %1 step %c1_i32  : i32 {
      %c1_i32_7 = arith.constant 1 : i32
      %10 = arith.muli %arg8, %c1_i32_7 : i32
      %c0_i32_8 = arith.constant 0 : i32
      %11 = arith.addi %c0_i32_8, %10 : i32
      %12 = arith.addi %0, %11 : i32
      %13 = arith.index_cast %12 : i32 to index
      %14 = memref.load %arg1[%13] : memref<256xi32, #tpu.memory_space<smem>>
      %15 = arith.index_cast %14 : i32 to index
      %c0_9 = arith.constant 0 : index
      %16 = vector.load %arg3[%15, %c0_9] : memref<100x32xf32, #tpu.memory_space<vmem>>, vector<1x32xf32>
      %17 = vector.shape_cast %16 : vector<1x32xf32> to vector<32xf32>
      %18 = arith.index_cast %11 : i32 to index
      %c0_10 = arith.constant 0 : index
      %19 = vector.load %arg6[%18, %c0_10] : memref<256x32xf32, #tpu.memory_space<vmem>>, vector<1x32xf32>
      %20 = vector.shape_cast %19 : vector<1x32xf32> to vector<32xf32>
      %21 = vector.shape_cast %17 : vector<32xf32> to vector<1x32xf32>
      tpu.vector_store %arg6[%18, %c0_10], %21 {strides = array<i32>} : memref<256x32xf32, #tpu.memory_space<vmem>>, vector<1x32xf32>,
      %22 = arith.addi %0, %11 : i32
      %23 = arith.index_cast %22 : i32 to index
      %24 = memref.load %arg2[%23] : memref<256xi32, #tpu.memory_space<smem>>
      %25 = arith.index_cast %24 : i32 to index
      %c0_11 = arith.constant 0 : index
      %26 = vector.load %arg4[%25, %c0_11] : memref<50x32xf32, #tpu.memory_space<vmem>>, vector<1x32xf32>
      %27 = vector.shape_cast %26 : vector<1x32xf32> to vector<32xf32>
      %28 = arith.index_cast %11 : i32 to index
      %c0_12 = arith.constant 0 : index
      %29 = vector.load %arg7[%28, %c0_12] : memref<256x32xf32, #tpu.memory_space<vmem>>, vector<1x32xf32>
      %30 = vector.shape_cast %29 : vector<1x32xf32> to vector<32xf32>
      %31 = vector.shape_cast %27 : vector<32xf32> to vector<1x32xf32>
      tpu.vector_store %arg7[%28, %c0_12], %31 {strides = array<i32>} : memref<256x32xf32, #tpu.memory_space<vmem>>, vector<1x32xf32>,
    }
    %c256_i32_1 = arith.constant 256 : i32
    %c0 = arith.constant 0 : index
    %c0_2 = arith.constant 0 : index
    %2 = vector.load %arg6[%c0, %c0_2] : memref<256x32xf32, #tpu.memory_space<vmem>>, vector<256x32xf32>
    %3 = tpu.transpose %2, [1, 0] : vector<256x32xf32> -> vector<32x256xf32>
    %c0_3 = arith.constant 0 : index
    %c0_4 = arith.constant 0 : index
    %4 = vector.load %arg7[%c0_3, %c0_4] : memref<256x32xf32, #tpu.memory_space<vmem>>, vector<256x32xf32>
    %5 = tpu.transpose %4, [1, 0] : vector<256x32xf32> -> vector<32x256xf32>
    %6 = arith.mulf %3, %5 : vector<32x256xf32>
    %cst = arith.constant dense<0.000000e+00> : vector<256xf32>
    %7 = vector.multi_reduction <add>, %6, %cst [0] : vector<32x256xf32> to vector<256xf32>
    %8 = vector.shape_cast %7 : vector<256xf32> to vector<1x256xf32>
    %c0_5 = arith.constant 0 : index
    %c0_6 = arith.constant 0 : index
    %9 = vector.load %arg5[%c0_5, %c0_6] : memref<1x256xf32, #tpu.memory_space<vmem>>, vector<1x256xf32>
    tpu.vector_store %arg5[%c0_5, %c0_6], %8 {strides = array<i32>} : memref<1x256xf32, #tpu.memory_space<vmem>>, vector<1x256xf32>,
    return
  }
  func.func @transform_0(%arg0: i32, %arg1: memref<256xi32, #tpu.memory_space<smem>>, %arg2: memref<256xi32, #tpu.memory_space<smem>>) -> (i32, i32) {
    %c0_i32 = arith.constant 0 : i32
    %c0_i32_0 = arith.constant 0 : i32
    %c0_i32_1 = arith.constant 0 : i32
    return %c0_i32, %c0_i32_0 : i32, i32
  }
  func.func @transform_1(%arg0: i32, %arg1: memref<256xi32, #tpu.memory_space<smem>>, %arg2: memref<256xi32, #tpu.memory_space<smem>>) -> (i32, i32) {
    %c0_i32 = arith.constant 0 : i32
    %c0_i32_0 = arith.constant 0 : i32
    %c0_i32_1 = arith.constant 0 : i32
    return %c0_i32, %c0_i32_0 : i32, i32
  }
  func.func @transform_2(%arg0: i32, %arg1: memref<256xi32, #tpu.memory_space<smem>>, %arg2: memref<256xi32, #tpu.memory_space<smem>>) -> (i32, i32) {
    %c0_i32 = arith.constant 0 : i32
    %c0_i32_0 = arith.constant 0 : i32
    return %c0_i32, %arg0 : i32, i32
  }
}

</mosaic_0001>

<llo_original>
// kernel: tpu_custom_call.1
$region0: #{tpu_custom_call.1}
  #allocation0 [shape = 'u32[]', space=smem, size = 0x4, offset = 0x4, fixed_abs, tag = 'smem constant byte address 0x4 - core index']
  #allocation1 [shape = 'u32[144,128]{1,0:T(1,128)}', space=vmem, size = 0x12000, scoped, tag = 'internal scratch']
  #allocation2 [shape = 'f32[256,32]{1,0:T(8,128)}', space=vmem, size = 0x20000, scoped, tag = 'scratch operand']
  #allocation3 [shape = 'f32[256,32]{1,0:T(8,128)}', space=vmem, size = 0x20000, scoped, tag = 'scratch operand']
  #allocation4 [shape = 's32[1]{0}', space=sflag, size = 0x4, scoped, tag = 'scoped memory for tpu_custom_call.1']
  #allocation5 [shape = 'u8[1024]{0}', space=smem, size = 0x400, scoped, tag = 'prefetched SMEM operand 0']
  #allocation6 [shape = 'u8[1024]{0}', space=smem, size = 0x400, scoped, tag = 'prefetched SMEM operand 1']
  %s0 = inlined_call_operand.vmem [shape: s32[256], index: 0, kind: input, shape index: {}]
  %s1 = inlined_call_operand.vmem [shape: s32[256], index: 1, kind: input, shape index: {}]
  %s2 = inlined_call_operand.vmem [shape: f32[100,32], index: 2, kind: input, shape index: {}]
  %s3 = inlined_call_operand.vmem [shape: f32[50,32], index: 3, kind: input, shape index: {}]
  %s4 = inlined_call_operand.hbm [shape: f32[1,256], index: 4, kind: output, shape index: {}]
  %s5 = sld [smem:[#allocation0]]
  $region25: #{tpu_custom_call.1} parent=0
    _
  %s7 = ssub.s32 1, %s5
  %s8 = scalar_select 0, %s7, %s5
  %s9 = sshll.u32 %s0, 4
  %s10 = int_to_ptr.vmem [resolvable:$true] %s9
  %12 = dma.vmem_to_smem %s10, 32, [#allocation5], [#allocation4]
  %s13 = sshll.u32 %s1, 4
  %s14 = int_to_ptr.vmem [resolvable:$true] %s13
  %16 = dma.vmem_to_smem %s14, 32, [#allocation6], [#allocation4]
  %17 = dma.done [#allocation4], 64
  %18 = sfence
  $region1: #{tpu_custom_call.1} parent=0
    #allocation7 [shape = 'u8[1024]{0}', space=vmem, size = 0x400, scoped, tag = 'output window, operand 0, single buffered']
    #allocation8 [shape = 's32[1]{0}', space=sflag, size = 0x4, scoped, tag = 'scoped memory for tpu_custom_call.1']
    %19 = vsyncpa [#allocation8], 0
    // Predicated region
    $region2: #{tpu_custom_call.1} parent=1 // pred_check
      _
    $region3: #{tpu_custom_call.1} parent=1 // pred_check_branch
      %21 = sbr.rel (0) target = $region5
    $region4: #{tpu_custom_call.1} parent=1 // pred_region
      _
    $region5: #{tpu_custom_call.1} parent=1 // pred_fallthru
      _
    // Predicated region
    $region6: #{tpu_custom_call.1} parent=1 // pred_check
      _
    $region7: #{tpu_custom_call.1} parent=1 // pred_check_branch
      %23 = sbr.rel (0) target = $region9
    $region8: #{tpu_custom_call.1} parent=1 // pred_region
      _
    $region9: #{tpu_custom_call.1} parent=1 // pred_fallthru
      _
    %s24 = smul.u32 0, 256
    loop: start=0, step=1, limit=256
    $region10: #{tpu_custom_call.1} parent=1 // loop_pre_header
      _
    $region11: #{tpu_custom_call.1} parent=1 // loop_header
      %s26 = sphi 0, %s30
      %p27 = scmp.ge.s32.totalorder %s26, 256
    $region12: #{tpu_custom_call.1} parent=1 // loop_header_branch
      %29 = sbr.rel (%p27) target = $region16
    $region13: #{tpu_custom_call.1} parent=1 // loop_body
      %s31 = sadd.s32 %s24, %s26
      %s32 = sld [smem:[#allocation5 + %s31]]
      %s33 = scalar_lea.vmem %s2, %s32
      %v34 = vld [vmem:[%s33] sm:$0x1]
      %s35 = scalar_lea.vmem [#allocation2], %s26
      %vm36 = vcmask 253952
      %37 = vst.msk [vmem:[%s35] sm:$0x1] %vm36, %v34
      %s38 = sld [smem:[#allocation6 + %s31]]
      %s39 = scalar_lea.vmem %s3, %s38
      %v40 = vld [vmem:[%s39] sm:$0x1]
      %s41 = scalar_lea.vmem [#allocation3], %s26
      %42 = vst.msk [vmem:[%s41] sm:$0x1] %vm36, %v40
    $region14: #{tpu_custom_call.1} parent=1 // loop_footer
      %s30 = sadd.s32 1, %s26
    $region15: #{tpu_custom_call.1} parent=1 // loop_footer_branch
      %25 = sbr.rel target = $region11
    $region16: #{tpu_custom_call.1} parent=1 // loop_exit
      _
    %v43 = vld [vmem:[#allocation2] sm:$0xff]
    %v44 = vld [vmem:[#allocation2 + $0x8] sm:$0xff]
    %v45 = vld [vmem:[#allocation2 + $0x10] sm:$0xff]
    %v46 = vld [vmem:[#allocation2 + $0x18] sm:$0xff]
    %v47 = vld [vmem:[#allocation2 + $0x20] sm:$0xff]
    %v48 = vld [vmem:[#allocation2 + $0x28] sm:$0xff]
    %v49 = vld [vmem:[#allocation2 + $0x30] sm:$0xff]
    %v50 = vld [vmem:[#allocation2 + $0x38] sm:$0xff]
    %v51 = vld [vmem:[#allocation2 + $0x40] sm:$0xff]
    %v52 = vld [vmem:[#allocation2 + $0x48] sm:$0xff]
    %v53 = vld [vmem:[#allocation2 + $0x50] sm:$0xff]
    %v54 = vld [vmem:[#allocation2 + $0x58] sm:$0xff]
    %v55 = vld [vmem:[#allocation2 + $0x60] sm:$0xff]
    %v56 = vld [vmem:[#allocation2 + $0x68] sm:$0xff]
    %v57 = vld [vmem:[#allocation2 + $0x70] sm:$0xff]
    %v58 = vld [vmem:[#allocation2 + $0x78] sm:$0xff]
    %v59 = vld [vmem:[#allocation2 + $0x80] sm:$0xff]
    %v60 = vld [vmem:[#allocation2 + $0x88] sm:$0xff]
    %v61 = vld [vmem:[#allocation2 + $0x90] sm:$0xff]
    %v62 = vld [vmem:[#allocation2 + $0x98] sm:$0xff]
    %v63 = vld [vmem:[#allocation2 + $0xa0] sm:$0xff]
    %v64 = vld [vmem:[#allocation2 + $0xa8] sm:$0xff]
    %v65 = vld [vmem:[#allocation2 + $0xb0] sm:$0xff]
    %v66 = vld [vmem:[#allocation2 + $0xb8] sm:$0xff]
    %v67 = vld [vmem:[#allocation2 + $0xc0] sm:$0xff]
    %v68 = vld [vmem:[#allocation2 + $0xc8] sm:$0xff]
    %v69 = vld [vmem:[#allocation2 + $0xd0] sm:$0xff]
    %v70 = vld [vmem:[#allocation2 + $0xd8] sm:$0xff]
    %v71 = vld [vmem:[#allocation2 + $0xe0] sm:$0xff]
    %v72 = vld [vmem:[#allocation2 + $0xe8] sm:$0xff]
    %v73 = vld [vmem:[#allocation2 + $0xf0] sm:$0xff]
    %v74 = vld [vmem:[#allocation2 + $0xf8] sm:$0xff]
    %75 = vxpose.xlu0.b32.start [1/16] %v43, 128
    %76 = vxpose.xlu0.b32.cont [2/16] %v44, 128
    %77 = vxpose.xlu0.b32.cont [3/16] %v45, 128
    %78 = vxpose.xlu0.b32.cont [4/16] %v46, 128
    %79 = vxpose.xlu0.b32.cont [5/16] %v47, 128
    %80 = vxpose.xlu0.b32.cont [6/16] %v48, 128
    %81 = vxpose.xlu0.b32.cont [7/16] %v49, 128
    %82 = vxpose.xlu0.b32.cont [8/16] %v50, 128
    %83 = vxpose.xlu0.b32.cont [9/16] %v51, 128
    %84 = vxpose.xlu0.b32.cont [10/16] %v52, 128
    %85 = vxpose.xlu0.b32.cont [11/16] %v53, 128
    %86 = vxpose.xlu0.b32.cont [12/16] %v54, 128
    %87 = vxpose.xlu0.b32.cont [13/16] %v55, 128
    %88 = vxpose.xlu0.b32.cont [14/16] %v56, 128
    %89 = vxpose.xlu0.b32.cont [15/16] %v57, 128
    %90 = vxpose.xlu0.b32.end [16/16] %v58, 128
    %v91 = vpop.trf.xlu0
    %v92 = vpop.trf.xlu0
    %v93 = vpop.trf.xlu0
    %v94 = vpop.trf.xlu0
    %v95 = vpop.trf.xlu0
    %v96 = vpop.trf.xlu0
    %v97 = vpop.trf.xlu0
    %v98 = vpop.trf.xlu0
    %v99 = vpop.trf.xlu0
    %v100 = vpop.trf.xlu0
    %v101 = vpop.trf.xlu0
    %v102 = vpop.trf.xlu0
    %v103 = vpop.trf.xlu0
    %v104 = vpop.trf.xlu0
    %v105 = vpop.trf.xlu0
    %v106 = vpop.trf.xlu0
    %107 = vxpose.xlu0.b32.start [1/16] %v59, 128
    %108 = vxpose.xlu0.b32.cont [2/16] %v60, 128
    %109 = vxpose.xlu0.b32.cont [3/16] %v61, 128
    %110 = vxpose.xlu0.b32.cont [4/16] %v62, 128
    %111 = vxpose.xlu0.b32.cont [5/16] %v63, 128
    %112 = vxpose.xlu0.b32.cont [6/16] %v64, 128
    %113 = vxpose.xlu0.b32.cont [7/16] %v65, 128
    %114 = vxpose.xlu0.b32.cont [8/16] %v66, 128
    %115 = vxpose.xlu0.b32.cont [9/16] %v67, 128
    %116 = vxpose.xlu0.b32.cont [10/16] %v68, 128
    %117 = vxpose.xlu0.b32.cont [11/16] %v69, 128
    %118 = vxpose.xlu0.b32.cont [12/16] %v70, 128
    %119 = vxpose.xlu0.b32.cont [13/16] %v71, 128
    %120 = vxpose.xlu0.b32.cont [14/16] %v72, 128
    %121 = vxpose.xlu0.b32.cont [15/16] %v73, 128
    %122 = vxpose.xlu0.b32.end [16/16] %v74, 128
    %v123 = vpop.trf.xlu0
    %v124 = vpop.trf.xlu0
    %v125 = vpop.trf.xlu0
    %v126 = vpop.trf.xlu0
    %v127 = vpop.trf.xlu0
    %v128 = vpop.trf.xlu0
    %v129 = vpop.trf.xlu0
    %v130 = vpop.trf.xlu0
    %v131 = vpop.trf.xlu0
    %v132 = vpop.trf.xlu0
    %v133 = vpop.trf.xlu0
    %v134 = vpop.trf.xlu0
    %v135 = vpop.trf.xlu0
    %v136 = vpop.trf.xlu0
    %v137 = vpop.trf.xlu0
    %v138 = vpop.trf.xlu0
    %v139 = vld [vmem:[#allocation3] sm:$0xff]
    %v140 = vld [vmem:[#allocation3 + $0x8] sm:$0xff]
    %v141 = vld [vmem:[#allocation3 + $0x10] sm:$0xff]
    %v142 = vld [vmem:[#allocation3 + $0x18] sm:$0xff]
    %v143 = vld [vmem:[#allocation3 + $0x20] sm:$0xff]
    %v144 = vld [vmem:[#allocation3 + $0x28] sm:$0xff]
    %v145 = vld [vmem:[#allocation3 + $0x30] sm:$0xff]
    %v146 = vld [vmem:[#allocation3 + $0x38] sm:$0xff]
    %v147 = vld [vmem:[#allocation3 + $0x40] sm:$0xff]
    %v148 = vld [vmem:[#allocation3 + $0x48] sm:$0xff]
    %v149 = vld [vmem:[#allocation3 + $0x50] sm:$0xff]
    %v150 = vld [vmem:[#allocation3 + $0x58] sm:$0xff]
    %v151 = vld [vmem:[#allocation3 + $0x60] sm:$0xff]
    %v152 = vld [vmem:[#allocation3 + $0x68] sm:$0xff]
    %v153 = vld [vmem:[#allocation3 + $0x70] sm:$0xff]
    %v154 = vld [vmem:[#allocation3 + $0x78] sm:$0xff]
    %v155 = vld [vmem:[#allocation3 + $0x80] sm:$0xff]
    %v156 = vld [vmem:[#allocation3 + $0x88] sm:$0xff]
    %v157 = vld [vmem:[#allocation3 + $0x90] sm:$0xff]
    %v158 = vld [vmem:[#allocation3 + $0x98] sm:$0xff]
    %v159 = vld [vmem:[#allocation3 + $0xa0] sm:$0xff]
    %v160 = vld [vmem:[#allocation3 + $0xa8] sm:$0xff]
    %v161 = vld [vmem:[#allocation3 + $0xb0] sm:$0xff]
    %v162 = vld [vmem:[#allocation3 + $0xb8] sm:$0xff]
    %v163 = vld [vmem:[#allocation3 + $0xc0] sm:$0xff]
    %v164 = vld [vmem:[#allocation3 + $0xc8] sm:$0xff]
    %v165 = vld [vmem:[#allocation3 + $0xd0] sm:$0xff]
    %v166 = vld [vmem:[#allocation3 + $0xd8] sm:$0xff]
    %v167 = vld [vmem:[#allocation3 + $0xe0] sm:$0xff]
    %v168 = vld [vmem:[#allocation3 + $0xe8] sm:$0xff]
    %v169 = vld [vmem:[#allocation3 + $0xf0] sm:$0xff]
    %v170 = vld [vmem:[#allocation3 + $0xf8] sm:$0xff]
    %171 = vxpose.xlu0.b32.start [1/16] %v139, 128
    %172 = vxpose.xlu0.b32.cont [2/16] %v140, 128
    %173 = vxpose.xlu0.b32.cont [3/16] %v141, 128
    %174 = vxpose.xlu0.b32.cont [4/16] %v142, 128
    %175 = vxpose.xlu0.b32.cont [5/16] %v143, 128
    %176 = vxpose.xlu0.b32.cont [6/16] %v144, 128
    %177 = vxpose.xlu0.b32.cont [7/16] %v145, 128
    %178 = vxpose.xlu0.b32.cont [8/16] %v146, 128
    %179 = vxpose.xlu0.b32.cont [9/16] %v147, 128
    %180 = vxpose.xlu0.b32.cont [10/16] %v148, 128
    %181 = vxpose.xlu0.b32.cont [11/16] %v149, 128
    %182 = vxpose.xlu0.b32.cont [12/16] %v150, 128
    %183 = vxpose.xlu0.b32.cont [13/16] %v151, 128
    %184 = vxpose.xlu0.b32.cont [14/16] %v152, 128
    %185 = vxpose.xlu0.b32.cont [15/16] %v153, 128
    %186 = vxpose.xlu0.b32.end [16/16] %v154, 128
    %v187 = vpop.trf.xlu0
    %v188 = vpop.trf.xlu0
    %v189 = vpop.trf.xlu0
    %v190 = vpop.trf.xlu0
    %v191 = vpop.trf.xlu0
    %v192 = vpop.trf.xlu0
    %v193 = vpop.trf.xlu0
    %v194 = vpop.trf.xlu0
    %v195 = vpop.trf.xlu0
    %v196 = vpop.trf.xlu0
    %v197 = vpop.trf.xlu0
    %v198 = vpop.trf.xlu0
    %v199 = vpop.trf.xlu0
    %v200 = vpop.trf.xlu0
    %v201 = vpop.trf.xlu0
    %v202 = vpop.trf.xlu0
    %203 = vxpose.xlu0.b32.start [1/16] %v155, 128
    %204 = vxpose.xlu0.b32.cont [2/16] %v156, 128
    %205 = vxpose.xlu0.b32.cont [3/16] %v157, 128
    %206 = vxpose.xlu0.b32.cont [4/16] %v158, 128
    %207 = vxpose.xlu0.b32.cont [5/16] %v159, 128
    %208 = vxpose.xlu0.b32.cont [6/16] %v160, 128
    %209 = vxpose.xlu0.b32.cont [7/16] %v161, 128
    %210 = vxpose.xlu0.b32.cont [8/16] %v162, 128
    %211 = vxpose.xlu0.b32.cont [9/16] %v163, 128
    %212 = vxpose.xlu0.b32.cont [10/16] %v164, 128
    %213 = vxpose.xlu0.b32.cont [11/16] %v165, 128
    %214 = vxpose.xlu0.b32.cont [12/16] %v166, 128
    %215 = vxpose.xlu0.b32.cont [13/16] %v167, 128
    %216 = vxpose.xlu0.b32.cont [14/16] %v168, 128
    %217 = vxpose.xlu0.b32.cont [15/16] %v169, 128
    %218 = vxpose.xlu0.b32.end [16/16] %v170, 128
    %v219 = vpop.trf.xlu0
    %v220 = vpop.trf.xlu0
    %v221 = vpop.trf.xlu0
    %v222 = vpop.trf.xlu0
    %v223 = vpop.trf.xlu0
    %v224 = vpop.trf.xlu0
    %v225 = vpop.trf.xlu0
    %v226 = vpop.trf.xlu0
    %v227 = vpop.trf.xlu0
    %v228 = vpop.trf.xlu0
    %v229 = vpop.trf.xlu0
    %v230 = vpop.trf.xlu0
    %v231 = vpop.trf.xlu0
    %v232 = vpop.trf.xlu0
    %v233 = vpop.trf.xlu0
    %v234 = vpop.trf.xlu0
    %v235 = vmul.f32 %v91, %v187
    %v236 = vmul.f32 %v123, %v219
    %v237 = vmul.f32 %v92, %v188
    %v238 = vmul.f32 %v124, %v220
    %v239 = vmul.f32 %v93, %v189
    %v240 = vmul.f32 %v125, %v221
    %v241 = vmul.f32 %v94, %v190
    %v242 = vmul.f32 %v126, %v222
    %v243 = vadd.f32 %v235, %v237
    %v244 = vadd.f32 %v243, %v239
    %v245 = vadd.f32 %v244, %v241
    %v246 = vrot.slane %v245, 4
    %v247 = vadd.f32 %v245, %v246
    %v248 = vrot.slane %v247, 2
    %v249 = vadd.f32 %v247, %v248
    %v250 = vrot.slane %v249, 1
    %v251 = vadd.f32 %v249, %v250
    %v252 = vadd.f32 %v236, %v238
    %v253 = vadd.f32 %v252, %v240
    %v254 = vadd.f32 %v253, %v242
    %v255 = vrot.slane %v254, 4
    %v256 = vadd.f32 %v254, %v255
    %v257 = vrot.slane %v256, 2
    %v258 = vadd.f32 %v256, %v257
    %v259 = vrot.slane %v258, 1
    %v260 = vadd.f32 %v258, %v259
    %v263 = vcombine.low %v251, %v260
    %v265 = vunpack.c.l.s4 1966171168
    %v266 = vunpack.c.0.s8 %v265
    %v267 = vlaneseq
    %v268 = vshrl.u32 %v267, 7
    %v269 = vsub.s32 %v266, %v268
    %v270 = vrot.slane %v263, %v269
    %v272 = vunpack.c.l.s4 1966171168
    %v273 = vunpack.c.0.s8 %v272
    %v274 = vlaneseq
    %v275 = vshrl.u32 %v274, 7
    %v276 = vsub.s32 %v273, %v275
    %v277 = vrot.slane %v270, %v276
    %v279 = vlaneseq
    %vm280 = vcmp.ge.s32.totalorder %v279, 0
    %vm281 = vcmp.lt.s32.totalorder %v279, 256
    %vm282 = vmand %vm280, %vm281
    %283 = vst.msk [vmem:[#allocation7] sm:$0x3] %vm282, %v277
    // Predicated region
    $region17: #{tpu_custom_call.1} parent=1 // pred_check
      _
    $region18: #{tpu_custom_call.1} parent=1 // pred_check_branch
      %285 = sbr.rel (0) target = $region20
    $region19: #{tpu_custom_call.1} parent=1 // pred_region
      %s287 = ssub.s32 32, 32
      %288 = vsyncadd [#allocation8], %s287
      %s290 = sshll.u32 [#allocation7], 4
      %s291 = int_to_ptr.vmem [resolvable:$true] %s290
      %293 = dma.vmem_to_hbm [thread:$0]  %s291, 32, %s4, [#allocation8]
    $region20: #{tpu_custom_call.1} parent=1 // pred_fallthru
      _
    // Predicated region
    $region21: #{tpu_custom_call.1} parent=1 // pred_check
      _
    $region22: #{tpu_custom_call.1} parent=1 // pred_check_branch
      %295 = sbr.rel (0) target = $region24
    $region23: #{tpu_custom_call.1} parent=1 // pred_region
      %296 = dma.done [#allocation8], 32
    $region24: #{tpu_custom_call.1} parent=1 // pred_fallthru
      _
    %297 = vsyncpa [#allocation8], 1

</llo_original>
